<compile_context>
chip_gen: v6e
topology: v6e:2x2x1
jax: 0.10.0
libtpu: 0.0.40
codegen_flags: <defaults>
</compile_context>

<pallas_src>
import functools

import jax
import jax.numpy as jnp
from jax.experimental import pallas as pl
from jax.experimental.pallas import tpu as pltpu

_LANE = 128
_SUBLANE = 8
# Slabs at or below this many rows (~256 KiB f32) run as one full-extent block;
# anything larger always gets >= 2 grid steps (pipelining + v7x megacore).
_MIN_SPLIT_ROWS = 512
# Keep double-buffered in+out working set <= ~48 MiB so tiles that are fine on
# v5e/v6e (128 MiB VMEM) are also safe on v7x (64 MiB physical VMEM).
_MAX_WORKING_SET = 48 << 20
_HEADROOM = 4 << 20
# Never lower the scoped-VMEM limit below any generation's default (32 MiB on
# v6e/v7x); only ever raise it.
_MIN_VMEM_LIMIT = 32 << 20


def _leaky_softplus_kernel(x_ref, o_ref, *, alpha, beta, off):
    xf = x_ref[...].astype(jnp.float32)
    # Stable softplus: softplus(x) = max(x, 0) + log1p(exp(-|x|))
    # alpha*x + beta*max(x, 0) == max(x, alpha*x) when 0 <= alpha <= 1.
    if 0.0 <= alpha <= 1.0:
        lin = jnp.maximum(xf, alpha * xf)
    else:  # static (trace-time) fallback for unusual slopes
        lin = alpha * xf + beta * jnp.maximum(xf, 0.0)
    sp_rest = jnp.log1p(jnp.exp(-jnp.abs(xf)))  # EUP ops (free slot)
    o_ref[...] = (lin + beta * sp_rest + off).astype(o_ref.dtype)


def _leaky_softplus_jnp(v, alpha, beta, off):
    """Plain-jnp path for the <128-element tail (and tiny inputs)."""
    vf = v.astype(jnp.float32)
    if 0.0 <= alpha <= 1.0:
        lin = jnp.maximum(vf, alpha * vf)
    else:
        lin = alpha * vf + beta * jnp.maximum(vf, 0.0)
    return (lin + beta * jnp.log1p(jnp.exp(-jnp.abs(vf))) + off).astype(v.dtype)


def leaky_softplus(x, negative_slope=0.05, offset=-0.6931, *, row_tile=8192):
    """Elementwise LeakySoftplus via Pallas. Any shape, same shape/dtype out."""
    alpha = float(negative_slope)
    beta = 1.0 - alpha
    off = beta * float(offset)

    orig_shape = x.shape
    dtype = x.dtype
    itemsize = jnp.dtype(dtype).itemsize

    flat = x.reshape(-1)
    n = flat.shape[0]

    n_main = (n // _LANE) * _LANE
    tail_n = n - n_main

    if n_main == 0:
        # Fewer than 128 elements: a kernel launch is pure overhead.
        return _leaky_softplus_jnp(flat, alpha, beta, off).reshape(orig_shape)

    rows = n_main // _LANE
    slab = (flat[:n_main] if tail_n else flat).reshape(rows, _LANE)

    # Sanitize user row_tile to a sublane multiple.
    row_tile = max((int(row_tile) // _SUBLANE) * _SUBLANE, _SUBLANE)

    # Block-size selection.
    if rows <= _MIN_SPLIT_ROWS:
        block_rows = rows  # full-extent block: no (8,128) divisibility needed
    else:
        # v7x-safe cap: 4 * block_bytes + headroom <= _MAX_WORKING_SET.
        max_rows = ((_MAX_WORKING_SET - _HEADROOM) // 4) // (_LANE * itemsize)
        max_rows = max((max_rows // _SUBLANE) * _SUBLANE, _SUBLANE)
        # At least 2 grid steps for medium inputs (overlap + megacore sharding).
        half = -(-rows // 2)
        half = ((half + _SUBLANE - 1) // _SUBLANE) * _SUBLANE
        block_rows = min(row_tile, max_rows, half)
    grid = (pl.cdiv(rows, block_rows),)

    block_bytes = block_rows * _LANE * itemsize
    needed = 4 * block_bytes + _HEADROOM          # in + out, double-buffered
    vmem_limit = int(max(needed, _MIN_VMEM_LIMIT))  # only ever raise the default

    kernel = functools.partial(
        _leaky_softplus_kernel, alpha=alpha, beta=beta, off=off
    )

    main_out = pl.pallas_call(
        kernel,
        out_shape=jax.ShapeDtypeStruct((rows, _LANE), dtype),
        grid=grid,
        in_specs=[pl.BlockSpec((block_rows, _LANE), lambda i: (i, 0))],
        out_specs=pl.BlockSpec((block_rows, _LANE), lambda i: (i, 0)),
        compiler_params=pltpu.CompilerParams(
            dimension_semantics=("parallel",),
            vmem_limit_bytes=vmem_limit,
        ),
    )(slab)

    if tail_n:
        tail_out = _leaky_softplus_jnp(flat[n_main:], alpha, beta, off)
        return jnp.concatenate([main_out.reshape(-1), tail_out]).reshape(orig_shape)
    return main_out.reshape(orig_shape)


def leaky_softplus_ref(x, negative_slope=0.05, offset=-0.6931):
    alpha = negative_slope
    off = (1.0 - alpha) * offset
    return alpha * x + (1.0 - alpha) * jax.nn.softplus(x) + off


if __name__ == "__main__":
    key = jax.random.PRNGKey(0)
    k0, k1, k2, k3 = jax.random.split(key, 4)

    # Primary test: NCHW-style input (128-aligned -> no tail, single block).
    x1 = jax.random.normal(k0, (2, 4, 16, 16), dtype=jnp.float32) * 3.0
    y1 = jax.block_until_ready(leaky_softplus(x1))
    assert y1.shape == x1.shape and y1.dtype == x1.dtype
    assert jnp.allclose(y1, leaky_softplus_ref(x1), atol=1e-5, rtol=1e-5)

    # Unaligned size -> exercises the aligned-prefix + jnp-tail stitch path.
    x2 = jax.random.normal(k1, (3, 5, 7, 11), dtype=jnp.float32) * 3.0
    y2 = jax.block_until_ready(leaky_softplus(x2))
    assert y2.shape == x2.shape and y2.dtype == x2.dtype
    assert jnp.allclose(y2, leaky_softplus_ref(x2), atol=1e-5, rtol=1e-5)

    # Multi-block path (rows > _MIN_SPLIT_ROWS) with default tile: >=2 grid
    # steps and a ragged (masked) last block.
    x3 = jax.random.normal(k2, (523 * 128,), dtype=jnp.float32) * 3.0
    y3 = jax.block_until_ready(leaky_softplus(x3))
    assert y3.shape == x3.shape and y3.dtype == x3.dtype
    assert jnp.allclose(y3, leaky_softplus_ref(x3), atol=1e-5, rtol=1e-5)

    # Same input with a tiny user row_tile: many grid steps, masked last block.
    y4 = jax.block_until_ready(leaky_softplus(x3, row_tile=8))
    assert jnp.allclose(y4, leaky_softplus_ref(x3), atol=1e-5, rtol=1e-5)

    print("KERNEL_OK")
</pallas_src>

<mosaic_0001>
module attributes {stable_mosaic.version = 11 : i64} {
  func.func @_leaky_softplus_kernel(%arg0: i32, %arg1: memref<16x128xf32, #tpu.memory_space<vmem>>, %arg2: memref<16x128xf32, #tpu.memory_space<vmem>>) attributes {dimension_semantics = [#tpu.dimension_semantics<parallel>], iteration_bounds = array<i64: 1>, scalar_prefetch = 0 : i64, scratch_operands = 0 : i64, tpu.core_type = #tpu.core_type<tc>, window_params = [{transform_indices = @transform_0, window_bounds = array<i64: 16, 128>}, {transform_indices = @transform_1, window_bounds = array<i64: 16, 128>}]} {
    %c0 = arith.constant 0 : index
    %c0_0 = arith.constant 0 : index
    %0 = vector.load %arg1[%c0, %c0_0] : memref<16x128xf32, #tpu.memory_space<vmem>>, vector<16x128xf32>
    %cst = arith.constant 5.000000e-02 : f32
    %1 = vector.broadcast %cst : f32 to vector<16x128xf32>
    %2 = arith.mulf %1, %0 : vector<16x128xf32>
    %3 = arith.maximumf %0, %2 : vector<16x128xf32>
    %4 = math.absf %0 : vector<16x128xf32>
    %cst_1 = arith.constant 0.000000e+00 : f32
    %5 = vector.broadcast %cst_1 : f32 to vector<16x128xf32>
    %6 = arith.subf %5, %4 : vector<16x128xf32>
    %7 = math.exp %6 : vector<16x128xf32>
    %8 = math.log1p %7 : vector<16x128xf32>
    %cst_2 = arith.constant 0.949999988 : f32
    %9 = vector.broadcast %cst_2 : f32 to vector<16x128xf32>
    %10 = arith.mulf %9, %8 : vector<16x128xf32>
    %11 = arith.addf %3, %10 : vector<16x128xf32>
    %cst_3 = arith.constant -6.584450e-01 : f32
    %12 = vector.broadcast %cst_3 : f32 to vector<16x128xf32>
    %13 = arith.addf %11, %12 : vector<16x128xf32>
    %c0_4 = arith.constant 0 : index
    %c0_5 = arith.constant 0 : index
    %14 = vector.load %arg2[%c0_4, %c0_5] : memref<16x128xf32, #tpu.memory_space<vmem>>, vector<16x128xf32>
    tpu.vector_store %arg2[%c0_4, %c0_5], %13 {strides = array<i32>} : memref<16x128xf32, #tpu.memory_space<vmem>>, vector<16x128xf32>,
    return
  }
  func.func @transform_0(%arg0: i32) -> (i32, i32) {
    %c0_i32 = arith.constant 0 : i32
    %c0_i32_0 = arith.constant 0 : i32
    return %arg0, %c0_i32 : i32, i32
  }
  func.func @transform_1(%arg0: i32) -> (i32, i32) {
    %c0_i32 = arith.constant 0 : i32
    %c0_i32_0 = arith.constant 0 : i32
    return %arg0, %c0_i32 : i32, i32
  }
}

</mosaic_0001>

<llo_original>
// kernel: tpu_custom_call.1
$region0: #{tpu_custom_call.1}
  #allocation0 [shape = 'u32[]', space=smem, size = 0x4, offset = 0x4, fixed_abs, tag = 'smem constant byte address 0x4 - core index']
  #allocation1 [shape = 'u32[144,128]{1,0:T(1,128)}', space=vmem, size = 0x12000, scoped, tag = 'internal scratch']
  %s0 = inlined_call_operand.hbm [shape: f32[16,128], index: 0, kind: input, shape index: {}]
  %s1 = inlined_call_operand.hbm [shape: f32[16,128], index: 1, kind: output, shape index: {}]
  %s2 = sld [smem:[#allocation0]]
  $region18: #{tpu_custom_call.1} parent=0
    _
  %s4 = ssub.s32 1, %s2
  %s5 = scalar_select 0, %s4, %s2
  $region1: #{tpu_custom_call.1} parent=0
    #allocation2 [shape = 'u8[8192]{0}', space=vmem, size = 0x2000, scoped, tag = 'input window, operand 0, single buffered']
    #allocation3 [shape = 's32[1]{0}', space=sflag, size = 0x4, scoped, tag = 'scoped memory for tpu_custom_call.1']
    #allocation4 [shape = 's32[1]{0}', space=sflag, size = 0x4, scoped, tag = 'scoped memory for tpu_custom_call.1']
    #allocation5 [shape = 'u8[8192]{0}', space=vmem, size = 0x2000, scoped, tag = 'output window, operand 0, single buffered']
    %6 = vsyncpa [#allocation3], 0
    %7 = vsyncpa [#allocation4], 0
    // Predicated region
    $region2: #{tpu_custom_call.1} parent=1 // pred_check
      _
    $region3: #{tpu_custom_call.1} parent=1 // pred_check_branch
      %9 = sbr.rel (0) target = $region5
    $region4: #{tpu_custom_call.1} parent=1 // pred_region
      %s11 = ssub.s32 256, 256
      %12 = vsyncadd [#allocation3], %s11
      %s13 = sshll.u32 [#allocation2], 4
      %s14 = int_to_ptr.vmem [resolvable:$true] %s13
      %19 = dma.hbm_to_vmem [thread:$0]  %s0, 256, %s14, [#allocation3], 128, 128, 8
    $region5: #{tpu_custom_call.1} parent=1 // pred_fallthru
      _
    // Predicated region
    $region6: #{tpu_custom_call.1} parent=1 // pred_check
      _
    $region7: #{tpu_custom_call.1} parent=1 // pred_check_branch
      %21 = sbr.rel (0) target = $region9
    $region8: #{tpu_custom_call.1} parent=1 // pred_region
      %22 = dma.done [#allocation3], 256
    $region9: #{tpu_custom_call.1} parent=1 // pred_fallthru
      _
    %v23 = vld [vmem:[#allocation2] sm:$0xff]
    %v24 = vld [vmem:[#allocation2 + $0x8] sm:$0xff]
    %v25 = vmul.f32 %v23, 0.05
    %v26 = vmul.f32 %v24, 0.05
    %v27 = vmax.f32 %v23, %v25
    %v28 = vmax.f32 %v24, %v26
    %v29 = vand.u32 2147483647, %v23
    %v30 = vand.u32 2147483647, %v24
    %v31 = vsub.f32 0.0, %v29
    %v32 = vsub.f32 0.0, %v30
    %v33 = vmul.f32 %v31, 1.442695
    %v34 = vpow.pop %v33
    %v35 = vmul.f32 %v32, 1.442695
    %v36 = vpow.pop %v35
    %v37 = vadd.f32 %v34, 1.0
    %v38 = vlog2.pop %v37
    %v39 = vmul.f32 %v38, 0.6931472
    %v40 = vmul.f32 -0.5, %v34
    %v41 = vadd.f32 %v40, 1.0
    %v42 = vmul.f32 %v41, %v34
    %v43 = vand.u32 2147483647, %v34
    %vm44 = vcmp.lt.f32.partialorder %v43, 0.0004427343
    %v45 = vsel %vm44, %v42, %v39
    %v46 = vadd.f32 %v36, 1.0
    %v47 = vlog2.pop %v46
    %v48 = vmul.f32 %v47, 0.6931472
    %v49 = vmul.f32 -0.5, %v36
    %v50 = vadd.f32 %v49, 1.0
    %v51 = vmul.f32 %v50, %v36
    %v52 = vand.u32 2147483647, %v36
    %vm53 = vcmp.lt.f32.partialorder %v52, 0.0004427343
    %v54 = vsel %vm53, %v51, %v48
    %v55 = vmul.f32 %v45, 0.95
    %v56 = vmul.f32 %v54, 0.95
    %v57 = vadd.f32 %v27, %v55
    %v58 = vadd.f32 %v28, %v56
    %v59 = vadd.f32 %v57, -0.658445
    %v60 = vadd.f32 %v58, -0.658445
    %61 = vst [vmem:[#allocation5] sm:$0xff] %v59
    %62 = vst [vmem:[#allocation5 + $0x8] sm:$0xff] %v60
    // Predicated region
    $region10: #{tpu_custom_call.1} parent=1 // pred_check
      _
    $region11: #{tpu_custom_call.1} parent=1 // pred_check_branch
      %64 = sbr.rel (0) target = $region13
    $region12: #{tpu_custom_call.1} parent=1 // pred_region
      %s66 = ssub.s32 256, 256
      %67 = vsyncadd [#allocation4], %s66
      %s68 = sshll.u32 [#allocation5], 4
      %s69 = int_to_ptr.vmem [resolvable:$true] %s68
      %74 = dma.vmem_to_hbm [thread:$0]  %s69, 256, %s1, [#allocation4], 128, 128, 8
    $region13: #{tpu_custom_call.1} parent=1 // pred_fallthru
      _
    // Predicated region
    $region14: #{tpu_custom_call.1} parent=1 // pred_check
      _
    $region15: #{tpu_custom_call.1} parent=1 // pred_check_branch
      %76 = sbr.rel (0) target = $region17
    $region16: #{tpu_custom_call.1} parent=1 // pred_region
      %77 = dma.done [#allocation4], 256
    $region17: #{tpu_custom_call.1} parent=1 // pred_fallthru
      _
    %78 = vsyncpa [#allocation3], 1
    %79 = vsyncpa [#allocation4], 1

</llo_original>
